<compile_context>
chip_gen: v7x
topology: tpu7x:2x2x1
jax: 0.10.0
libtpu: 0.0.40
codegen_flags: <defaults>
</compile_context>

<pallas_src>
import functools

import jax
import jax.numpy as jnp
from jax.experimental import pallas as pl
from jax.experimental.pallas import tpu as pltpu


def _mlp_kernel(xt_ref, w0_ref, b0_ref, w1_ref, b1_ref, wl_ref, o_ref):
    """relu(W0 @ xT + b0) -> relu(W1 @ . + b1) -> sum(wl * ., axis=0)."""
    xt = xt_ref[...]                                                   # (D, tb)
    h = jnp.dot(w0_ref[...], xt, preferred_element_type=jnp.float32)   # (H0, tb)
    h = jnp.maximum(h + b0_ref[...], 0.0)                              # bias (H0,1) bcast over lanes
    h = jnp.dot(w1_ref[...], h.astype(w1_ref.dtype),
                preferred_element_type=jnp.float32)                    # (H1, tb)
    h = jnp.maximum(h + b1_ref[...], 0.0)
    # Final Linear(H1 -> 1, bias=False): VPU multiply + sublane reduction
    # (avoids paying a full MXU pass for one output row).
    o = jnp.sum(h * wl_ref[...], axis=0, keepdims=True)                # (1, tb)
    o_ref[...] = o.astype(o_ref.dtype)


@functools.partial(jax.jit, static_argnames=("tb", "compute_dtype"))
def discriminator_forward(x, w0, b0, w1, b1, wl, *, tb=None, compute_dtype=None):
    """Forward pass.

    x : (B, D) float32
    w0: (H0, D),  b0: (H0, 1)   -- PyTorch Linear layout (out, in)
    w1: (H1, H0), b1: (H1, 1)
    wl: (1, H1)                 -- final Linear(H1, 1, bias=False)
    returns (B, 1) float32
    """
    B, D = x.shape
    H0 = w0.shape[0]
    H1 = w1.shape[0]

    if tb is None:
        # Small/awkward B: one grid step. Large B: 512-wide lane tiles, which
        # keeps >= 2 parallel tiles so both v7x TensorCores get work.
        tb = 512 if (B > 512 and B % 512 == 0) else B
    assert B % tb == 0, "batch must be divisible by the batch tile"
    assert tb == B or tb % 128 == 0, "partial batch tiles must be lane multiples"

    xt = x.T                                   # (D, B): batch on the lane axis
    wl_col = wl.reshape(H1, 1)                 # (H1, 1): broadcast over lanes

    if compute_dtype is not None:              # e.g. jnp.bfloat16 on v6e/v7x
        xt = xt.astype(compute_dtype)
        w0 = w0.astype(compute_dtype)
        w1 = w1.astype(compute_dtype)
        wl_col = wl_col.astype(compute_dtype)

    flops = 2 * B * (D * H0 + H0 * H1 + H1)
    bytes_accessed = (
        xt.size * xt.dtype.itemsize
        + (w0.size + w1.size + wl_col.size) * w0.dtype.itemsize
        + (b0.size + b1.size + B) * 4
    )

    grid = (B // tb,)
    out = pl.pallas_call(
        _mlp_kernel,
        out_shape=jax.ShapeDtypeStruct((1, B), x.dtype),   # lane-dense output slab
        grid_spec=pl.GridSpec(
            grid=grid,
            in_specs=[
                pl.BlockSpec((D, tb), lambda i: (0, i)),    # x^T tile (batch on lanes)
                pl.BlockSpec((H0, D), lambda i: (0, 0)),    # w0 (resident)
                pl.BlockSpec((H0, 1), lambda i: (0, 0)),    # b0
                pl.BlockSpec((H1, H0), lambda i: (0, 0)),   # w1 (resident)
                pl.BlockSpec((H1, 1), lambda i: (0, 0)),    # b1
                pl.BlockSpec((H1, 1), lambda i: (0, 0)),    # wl column
                # TODO(synk): for very wide layers on v7x (64 MiB VMEM), drop the
                # redundant double buffer on grid-invariant weights
                # (pipeline_mode=pl.Buffered(1)) or add a K/N grid axis.
            ],
            out_specs=pl.BlockSpec((1, tb), lambda i: (0, i)),
        ),
        compiler_params=pltpu.CompilerParams(
            dimension_semantics=("parallel",),
        ),
        cost_estimate=pl.CostEstimate(
            flops=flops, transcendentals=0, bytes_accessed=bytes_accessed),
    )(xt, w0, b0, w1, b1, wl_col)

    return out.T                               # (B, 1)


def _init_params(key, input_dim, lst_num_hidden):
    """Uniform(-1/sqrt(fan_in), 1/sqrt(fan_in)) init, PyTorch Linear layout (out, in)."""
    dims = [input_dim] + lst_num_hidden
    params = []
    for i in range(len(dims) - 1):
        fan_in, fan_out = dims[i], dims[i + 1]
        key, kw, kb = jax.random.split(key, 3)
        bound = fan_in ** -0.5
        w = jax.random.uniform(kw, (fan_out, fan_in), jnp.float32, -bound, bound)
        b = jax.random.uniform(kb, (fan_out, 1), jnp.float32, -bound, bound)
        params.append((w, b))
    # Final Linear(h_last, 1, bias=False); kappa=None -> no L1 constraint applied.
    fan_in = dims[-1]
    key, kw = jax.random.split(key)
    bound = fan_in ** -0.5
    wl = jax.random.uniform(kw, (1, fan_in), jnp.float32, -bound, bound)
    return params, wl


def _reference_forward(x, params, wl):
    h = x
    for (w, b) in params:
        h = jnp.maximum(h @ w.T + b.T, 0.0)   # lst_activation[i] == ReLU
    return h @ wl.T


if __name__ == "__main__":
    # Small shapes consistent with the module: input_dim=32, hidden=[64, 32], batch=16.
    B, D = 16, 32
    lst_num_hidden = [64, 32]                  # lst_activation = [relu, relu]

    key = jax.random.PRNGKey(0)
    key, kx = jax.random.split(key)
    x = jax.random.normal(kx, (B, D), jnp.float32)

    params, wl = _init_params(key, D, lst_num_hidden)
    (w0, b0), (w1, b1) = params

    out = discriminator_forward(x, w0, b0, w1, b1, wl)   # tb defaults to B -> grid=(1,)
    out = jax.block_until_ready(out)

    ref = _reference_forward(x, params, wl)
    assert out.shape == (B, 1), out.shape
    assert jnp.allclose(out, ref, atol=1e-5, rtol=1e-5), "mismatch vs reference"

    print("KERNEL_OK")
</pallas_src>

<mosaic_0001>
module attributes {stable_mosaic.version = 11 : i64} {
  func.func @_mlp_kernel(%arg0: i32, %arg1: memref<32x16xf32, #tpu.memory_space<vmem>>, %arg2: memref<64x32xf32, #tpu.memory_space<vmem>>, %arg3: memref<64x1xf32, #tpu.memory_space<vmem>>, %arg4: memref<32x64xf32, #tpu.memory_space<vmem>>, %arg5: memref<32x1xf32, #tpu.memory_space<vmem>>, %arg6: memref<32x1xf32, #tpu.memory_space<vmem>>, %arg7: memref<1x16xf32, #tpu.memory_space<vmem>>) attributes {dimension_semantics = [#tpu.dimension_semantics<parallel>], iteration_bounds = array<i64: 1>, scalar_prefetch = 0 : i64, scratch_operands = 0 : i64, tpu.core_type = #tpu.core_type<tc>, window_params = [{transform_indices = @transform_0, window_bounds = array<i64: 32, 16>}, {pipeline_mode = #tpu.pipeline_mode<synchronous>, transform_indices = @transform_1, window_bounds = array<i64: 64, 32>}, {pipeline_mode = #tpu.pipeline_mode<synchronous>, transform_indices = @transform_2, window_bounds = array<i64: 64, 1>}, {pipeline_mode = #tpu.pipeline_mode<synchronous>, transform_indices = @transform_3, window_bounds = array<i64: 32, 64>}, {pipeline_mode = #tpu.pipeline_mode<synchronous>, transform_indices = @transform_4, window_bounds = array<i64: 32, 1>}, {pipeline_mode = #tpu.pipeline_mode<synchronous>, transform_indices = @transform_5, window_bounds = array<i64: 32, 1>}, {transform_indices = @transform_6, window_bounds = array<i64: 1, 16>}]} {
    %c0 = arith.constant 0 : index
    %c0_0 = arith.constant 0 : index
    %0 = vector.load %arg1[%c0, %c0_0] : memref<32x16xf32, #tpu.memory_space<vmem>>, vector<32x16xf32>
    %c0_1 = arith.constant 0 : index
    %c0_2 = arith.constant 0 : index
    %1 = vector.load %arg2[%c0_1, %c0_2] : memref<64x32xf32, #tpu.memory_space<vmem>>, vector<64x32xf32>
    %cst = arith.constant dense<0.000000e+00> : vector<64x16xf32>
    %2 = tpu.matmul %1, %0, %cst {dimension_numbers = #tpu.dot_dimension_numbers<[1], [0], [0], [1], [0, 0, 1, 1], [], []>} : vector<64x32xf32>, vector<32x16xf32>, vector<64x16xf32> -> vector<64x16xf32>
    %c0_3 = arith.constant 0 : index
    %c0_4 = arith.constant 0 : index
    %3 = vector.load %arg3[%c0_3, %c0_4] : memref<64x1xf32, #tpu.memory_space<vmem>>, vector<64x1xf32>
    %4 = vector.broadcast %3 : vector<64x1xf32> to vector<64x16xf32>
    %5 = arith.addf %2, %4 : vector<64x16xf32>
    %cst_5 = arith.constant 0.000000e+00 : f32
    %6 = vector.broadcast %cst_5 : f32 to vector<64x16xf32>
    %7 = arith.maximumf %5, %6 : vector<64x16xf32>
    %c0_6 = arith.constant 0 : index
    %c0_7 = arith.constant 0 : index
    %8 = vector.load %arg4[%c0_6, %c0_7] : memref<32x64xf32, #tpu.memory_space<vmem>>, vector<32x64xf32>
    %cst_8 = arith.constant dense<0.000000e+00> : vector<32x16xf32>
    %9 = tpu.matmul %8, %7, %cst_8 {dimension_numbers = #tpu.dot_dimension_numbers<[1], [0], [0], [1], [0, 0, 1, 1], [], []>} : vector<32x64xf32>, vector<64x16xf32>, vector<32x16xf32> -> vector<32x16xf32>
    %c0_9 = arith.constant 0 : index
    %c0_10 = arith.constant 0 : index
    %10 = vector.load %arg5[%c0_9, %c0_10] : memref<32x1xf32, #tpu.memory_space<vmem>>, vector<32x1xf32>
    %11 = vector.broadcast %10 : vector<32x1xf32> to vector<32x16xf32>
    %12 = arith.addf %9, %11 : vector<32x16xf32>
    %cst_11 = arith.constant 0.000000e+00 : f32
    %13 = vector.broadcast %cst_11 : f32 to vector<32x16xf32>
    %14 = arith.maximumf %12, %13 : vector<32x16xf32>
    %c0_12 = arith.constant 0 : index
    %c0_13 = arith.constant 0 : index
    %15 = vector.load %arg6[%c0_12, %c0_13] : memref<32x1xf32, #tpu.memory_space<vmem>>, vector<32x1xf32>
    %16 = vector.broadcast %15 : vector<32x1xf32> to vector<32x16xf32>
    %17 = arith.mulf %14, %16 : vector<32x16xf32>
    %cst_14 = arith.constant dense<0.000000e+00> : vector<16xf32>
    %18 = vector.multi_reduction <add>, %17, %cst_14 [0] : vector<32x16xf32> to vector<16xf32>
    %19 = vector.shape_cast %18 : vector<16xf32> to vector<1x16xf32>
    %c0_15 = arith.constant 0 : index
    %c0_16 = arith.constant 0 : index
    %20 = vector.load %arg7[%c0_15, %c0_16] : memref<1x16xf32, #tpu.memory_space<vmem>>, vector<1x16xf32>
    tpu.vector_store %arg7[%c0_15, %c0_16], %19 {strides = array<i32>} : memref<1x16xf32, #tpu.memory_space<vmem>>, vector<1x16xf32>,
    return
  }
  func.func @transform_0(%arg0: i32) -> (i32, i32) {
    %c0_i32 = arith.constant 0 : i32
    %c0_i32_0 = arith.constant 0 : i32
    return %c0_i32, %arg0 : i32, i32
  }
  func.func @transform_1(%arg0: i32) -> (i32, i32) {
    %c0_i32 = arith.constant 0 : i32
    %c0_i32_0 = arith.constant 0 : i32
    %c0_i32_1 = arith.constant 0 : i32
    return %c0_i32, %c0_i32_0 : i32, i32
  }
  func.func @transform_2(%arg0: i32) -> (i32, i32) {
    %c0_i32 = arith.constant 0 : i32
    %c0_i32_0 = arith.constant 0 : i32
    %c0_i32_1 = arith.constant 0 : i32
    return %c0_i32, %c0_i32_0 : i32, i32
  }
  func.func @transform_3(%arg0: i32) -> (i32, i32) {
    %c0_i32 = arith.constant 0 : i32
    %c0_i32_0 = arith.constant 0 : i32
    %c0_i32_1 = arith.constant 0 : i32
    return %c0_i32, %c0_i32_0 : i32, i32
  }
  func.func @transform_4(%arg0: i32) -> (i32, i32) {
    %c0_i32 = arith.constant 0 : i32
    %c0_i32_0 = arith.constant 0 : i32
    %c0_i32_1 = arith.constant 0 : i32
    return %c0_i32, %c0_i32_0 : i32, i32
  }
  func.func @transform_5(%arg0: i32) -> (i32, i32) {
    %c0_i32 = arith.constant 0 : i32
    %c0_i32_0 = arith.constant 0 : i32
    %c0_i32_1 = arith.constant 0 : i32
    return %c0_i32, %c0_i32_0 : i32, i32
  }
  func.func @transform_6(%arg0: i32) -> (i32, i32) {
    %c0_i32 = arith.constant 0 : i32
    %c0_i32_0 = arith.constant 0 : i32
    return %c0_i32, %arg0 : i32, i32
  }
}

</mosaic_0001>

<llo_original>
// kernel: discriminator_forward.1
$region0: #{discriminator_forward.1}
  #allocation0 [shape = 'u32[]', space=smem, size = 0x4, offset = 0x4, fixed_abs, tag = 'smem constant byte address 0x4 - core index']
  #allocation1 [shape = 'u32[144,128]{1,0:T(1,128)}', space=vmem, size = 0x12000, scoped, tag = 'internal scratch']
  %s0 = inlined_call_operand.vmem [shape: f32[32,16], index: 0, kind: input, shape index: {}]
  %s1 = inlined_call_operand.vmem [shape: f32[64,32], index: 1, kind: input, shape index: {}]
  %s2 = inlined_call_operand.vmem [shape: f32[64,1], index: 2, kind: input, shape index: {}]
  %s3 = inlined_call_operand.vmem [shape: f32[32,64], index: 3, kind: input, shape index: {}]
  %s4 = inlined_call_operand.vmem [shape: f32[32,1], index: 4, kind: input, shape index: {}]
  %s5 = inlined_call_operand.vmem [shape: f32[32,1], index: 5, kind: input, shape index: {}]
  %s6 = inlined_call_operand.hbm [shape: f32[1,16], index: 6, kind: output, shape index: {}]
  %s7 = sld [smem:[#allocation0]]
  $region34: #{discriminator_forward.1} parent=0
    _
  %s9 = ssub.s32 1, %s7
  %s10 = scalar_select 0, %s9, %s7
  $region1: #{discriminator_forward.1} parent=0
    #allocation2 [shape = 'u8[512]{0}', space=vmem, size = 0x400, scoped, tag = 'output window, operand 0, single buffered']
    #allocation3 [shape = 's32[1]{0}', space=sflag, size = 0x4, scoped, tag = 'scoped memory for discriminator_forward.1']
    %11 = vsyncpa [#allocation3], 0
    // Predicated region
    $region2: #{discriminator_forward.1} parent=1 // pred_check
      _
    $region3: #{discriminator_forward.1} parent=1 // pred_check_branch
      %13 = sbr.rel (0) target = $region5
    $region4: #{discriminator_forward.1} parent=1 // pred_region
      _
    $region5: #{discriminator_forward.1} parent=1 // pred_fallthru
      _
    // Predicated region
    $region6: #{discriminator_forward.1} parent=1 // pred_check
      _
    $region7: #{discriminator_forward.1} parent=1 // pred_check_branch
      %15 = sbr.rel (0) target = $region9
    $region8: #{discriminator_forward.1} parent=1 // pred_region
      _
    $region9: #{discriminator_forward.1} parent=1 // pred_fallthru
      _
    // Predicated region
    $region10: #{discriminator_forward.1} parent=1 // pred_check
      _
    $region11: #{discriminator_forward.1} parent=1 // pred_check_branch
      %17 = sbr.rel (0) target = $region13
    $region12: #{discriminator_forward.1} parent=1 // pred_region
      _
    $region13: #{discriminator_forward.1} parent=1 // pred_fallthru
      _
    // Predicated region
    $region14: #{discriminator_forward.1} parent=1 // pred_check
      _
    $region15: #{discriminator_forward.1} parent=1 // pred_check_branch
      %19 = sbr.rel (0) target = $region17
    $region16: #{discriminator_forward.1} parent=1 // pred_region
      _
    $region17: #{discriminator_forward.1} parent=1 // pred_fallthru
      _
    // Predicated region
    $region18: #{discriminator_forward.1} parent=1 // pred_check
      _
    $region19: #{discriminator_forward.1} parent=1 // pred_check_branch
      %21 = sbr.rel (0) target = $region21
    $region20: #{discriminator_forward.1} parent=1 // pred_region
      _
    $region21: #{discriminator_forward.1} parent=1 // pred_fallthru
      _
    // Predicated region
    $region22: #{discriminator_forward.1} parent=1 // pred_check
      _
    $region23: #{discriminator_forward.1} parent=1 // pred_check_branch
      %23 = sbr.rel (0) target = $region25
    $region24: #{discriminator_forward.1} parent=1 // pred_region
      _
    $region25: #{discriminator_forward.1} parent=1 // pred_fallthru
      _
    %v24 = vld [vmem:[%s0] sm:$0xff]
    %v25 = vld [vmem:[%s0 + $0x8] sm:$0xff]
    %v26 = vld [vmem:[%s0 + $0x10] sm:$0xff]
    %v27 = vld [vmem:[%s0 + $0x18] sm:$0xff]
    %v28 = vld [vmem:[%s1] sm:$0xff]
    %v29 = vld [vmem:[%s1 + $0x8] sm:$0xff]
    %v30 = vld [vmem:[%s1 + $0x10] sm:$0xff]
    %v31 = vld [vmem:[%s1 + $0x18] sm:$0xff]
    %v32 = vld [vmem:[%s1 + $0x20] sm:$0xff]
    %v33 = vld [vmem:[%s1 + $0x28] sm:$0xff]
    %v34 = vld [vmem:[%s1 + $0x30] sm:$0xff]
    %v35 = vld [vmem:[%s1 + $0x38] sm:$0xff]
    %v36 = vld [vmem:[%s2] sm:$0xff]
    %v37 = vld [vmem:[%s2 + $0x8] sm:$0xff]
    %v38 = vld [vmem:[%s2 + $0x10] sm:$0xff]
    %v39 = vld [vmem:[%s2 + $0x18] sm:$0xff]
    %v40 = vld [vmem:[%s2 + $0x20] sm:$0xff]
    %v41 = vld [vmem:[%s2 + $0x28] sm:$0xff]
    %v42 = vld [vmem:[%s2 + $0x30] sm:$0xff]
    %v43 = vld [vmem:[%s2 + $0x38] sm:$0xff]
    %45 = vset.pattern.permute.xlu0 0
    %46 = vperm.xlu0 %45, %v36
    %v47 = vpop.permute.xlu0 %46
    %50 = vset.pattern.permute.xlu0 0
    %51 = vperm.xlu0 %50, %v37
    %v52 = vpop.permute.xlu0 %51
    %55 = vset.pattern.permute.xlu0 0
    %56 = vperm.xlu0 %55, %v38
    %v57 = vpop.permute.xlu0 %56
    %60 = vset.pattern.permute.xlu0 0
    %61 = vperm.xlu0 %60, %v39
    %v62 = vpop.permute.xlu0 %61
    %65 = vset.pattern.permute.xlu0 0
    %66 = vperm.xlu0 %65, %v40
    %v67 = vpop.permute.xlu0 %66
    %70 = vset.pattern.permute.xlu0 0
    %71 = vperm.xlu0 %70, %v41
    %v72 = vpop.permute.xlu0 %71
    %75 = vset.pattern.permute.xlu0 0
    %76 = vperm.xlu0 %75, %v42
    %v77 = vpop.permute.xlu0 %76
    %80 = vset.pattern.permute.xlu0 0
    %81 = vperm.xlu0 %80, %v43
    %v82 = vpop.permute.xlu0 %81
    %vm84 = vcmask 261120
    %v86 = vsel %vm84, %v28, 0
    %v89 = vsel %vm84, %v29, 0
    %v92 = vsel %vm84, %v30, 0
    %v95 = vsel %vm84, %v31, 0
    %v98 = vsel %vm84, %v32, 0
    %v101 = vsel %vm84, %v33, 0
    %v104 = vsel %vm84, %v34, 0
    %v107 = vsel %vm84, %v35, 0
    %109 = vmatprep.subr.mxu0 0.0
    %110 = vmatpush1.msra.mxu0 %v24
    %111 = vmatprep.subr.mxu0 0.0
    %112 = vmatpush1.msra.mxu0 %v25
    %113 = vmatprep.subr.mxu0 0.0
    %114 = vmatpush1.msra.mxu0 %v26
    %115 = vmatprep.subr.mxu0 0.0
    %116 = vmatpush1.msra.mxu0 %v27
    %117 = vmatprep.subr.mxu0 0.0
    %118 = vmatpush1.msra.mxu0 0.0
    %119 = vmatprep.subr.mxu0 0.0
    %120 = vmatpush1.msra.mxu0 0.0
    %121 = vmatprep.subr.mxu0 0.0
    %122 = vmatpush1.msra.mxu0 0.0
    %123 = vmatprep.subr.mxu0 0.0
    %124 = vmatpush1.msra.mxu0 0.0
    %125 = vmatprep.subr.mxu0 0.0
    %126 = vmatpush1.msra.mxu0 0.0
    %127 = vmatprep.subr.mxu0 0.0
    %128 = vmatpush1.msra.mxu0 0.0
    %129 = vmatprep.subr.mxu0 0.0
    %130 = vmatpush1.msra.mxu0 0.0
    %131 = vmatprep.subr.mxu0 0.0
    %132 = vmatpush1.msra.mxu0 0.0
    %133 = vmatprep.subr.mxu0 0.0
    %134 = vmatpush1.msra.mxu0 0.0
    %135 = vmatprep.subr.mxu0 0.0
    %136 = vmatpush1.msra.mxu0 0.0
    %137 = vmatprep.subr.mxu0 0.0
    %138 = vmatpush1.msra.mxu0 0.0
    %139 = vmatprep.subr.mxu0 0.0
    %140 = vmatpush1.msra.mxu0 0.0
    %141 = vmatprep.subr.mxu0 0.0
    %142 = vmatpush1.msra.mxu0 0.0
    %143 = vmatprep.subr.mxu0 0.0
    %144 = vmatpush1.msra.mxu0 0.0
    %145 = vmatprep.subr.mxu0 0.0
    %146 = vmatpush1.msra.mxu0 0.0
    %147 = vmatprep.subr.mxu0 0.0
    %148 = vmatpush1.msra.mxu0 0.0
    %149 = vmatprep.subr.mxu0 0.0
    %150 = vmatpush1.msra.mxu0 0.0
    %151 = vmatprep.subr.mxu0 0.0
    %152 = vmatpush1.msra.mxu0 0.0
    %153 = vmatprep.subr.mxu0 0.0
    %154 = vmatpush1.msra.mxu0 0.0
    %155 = vmatprep.subr.mxu0 0.0
    %156 = vmatpush1.msra.mxu0 0.0
    %157 = vmatprep.subr.mxu0 0.0
    %158 = vmatpush1.msra.mxu0 0.0
    %159 = vmatprep.subr.mxu0 0.0
    %160 = vmatpush1.msra.mxu0 0.0
    %161 = vmatprep.subr.mxu0 0.0
    %162 = vmatpush1.msra.mxu0 0.0
    %163 = vmatprep.subr.mxu0 0.0
    %164 = vmatpush1.msra.mxu0 0.0
    %165 = vmatprep.subr.mxu0 0.0
    %166 = vmatpush1.msra.mxu0 0.0
    %167 = vmatprep.subr.mxu0 0.0
    %168 = vmatpush1.msra.mxu0 0.0
    %169 = vmatprep.subr.mxu0 0.0
    %170 = vmatpush1.msra.mxu0 0.0
    %171 = vmatprep.subr.mxu0 0.0
    %172 = vmatpush1.msra.mxu0 0.0
    %173 = vmatprep.mubr.f32.mxu0 0.0
    %174 = vmatmul.mubr.f32.gmra.mrb[0].mxu0 %v86
    %v175 = vpop.f32.mrb[0].mxu0
    %v176 = vadd.f32 %v47, %v175
    %v177 = vpop.f32.mrb[0].mxu0
    %178 = vmatprep.mubr.f32.mxu0 0.0
    %179 = vmatmul.mubr.f32.gmra.mrb[0].mxu0 %v89
    %v180 = vpop.f32.mrb[0].mxu0
    %v181 = vadd.f32 %v52, %v180
    %v182 = vpop.f32.mrb[0].mxu0
    %183 = vmatprep.mubr.f32.mxu0 0.0
    %184 = vmatmul.mubr.f32.gmra.mrb[0].mxu0 %v92
    %v185 = vpop.f32.mrb[0].mxu0
    %v186 = vadd.f32 %v57, %v185
    %v187 = vpop.f32.mrb[0].mxu0
    %188 = vmatprep.mubr.f32.mxu0 0.0
    %189 = vmatmul.mubr.f32.gmra.mrb[0].mxu0 %v95
    %v190 = vpop.f32.mrb[0].mxu0
    %v191 = vadd.f32 %v62, %v190
    %v192 = vpop.f32.mrb[0].mxu0
    %193 = vmatprep.mubr.f32.mxu0 0.0
    %194 = vmatmul.mubr.f32.gmra.mrb[0].mxu0 %v98
    %v195 = vpop.f32.mrb[0].mxu0
    %v196 = vadd.f32 %v67, %v195
    %v197 = vpop.f32.mrb[0].mxu0
    %198 = vmatprep.mubr.f32.mxu0 0.0
    %199 = vmatmul.mubr.f32.gmra.mrb[0].mxu0 %v101
    %v200 = vpop.f32.mrb[0].mxu0
    %v201 = vadd.f32 %v72, %v200
    %v202 = vpop.f32.mrb[0].mxu0
    %203 = vmatprep.mubr.f32.mxu0 0.0
    %204 = vmatmul.mubr.f32.gmra.mrb[0].mxu0 %v104
    %v205 = vpop.f32.mrb[0].mxu0
    %v206 = vadd.f32 %v77, %v205
    %v207 = vpop.f32.mrb[0].mxu0
    %208 = vmatprep.mubr.f32.mxu0 0.0
    %209 = vmatmul.mubr.f32.gmra.mrb[0].mxu0 %v107
    %v210 = vpop.f32.mrb[0].mxu0
    %v211 = vadd.f32 %v82, %v210
    %v212 = vpop.f32.mrb[0].mxu0
    %213 = vdwg.mxu0
    %v214 = vmax.f32 %v176, 0.0
    %v215 = vmax.f32 %v181, 0.0
    %v216 = vmax.f32 %v186, 0.0
    %v217 = vmax.f32 %v191, 0.0
    %v218 = vmax.f32 %v196, 0.0
    %v219 = vmax.f32 %v201, 0.0
    %v220 = vmax.f32 %v206, 0.0
    %v221 = vmax.f32 %v211, 0.0
    %v222 = vld [vmem:[%s3] sm:$0xff]
    %v223 = vld [vmem:[%s3 + $0x8] sm:$0xff]
    %v224 = vld [vmem:[%s3 + $0x10] sm:$0xff]
    %v225 = vld [vmem:[%s3 + $0x18] sm:$0xff]
    %v226 = vld [vmem:[%s4] sm:$0xff]
    %v227 = vld [vmem:[%s4 + $0x8] sm:$0xff]
    %v228 = vld [vmem:[%s4 + $0x10] sm:$0xff]
    %v229 = vld [vmem:[%s4 + $0x18] sm:$0xff]
    %231 = vset.pattern.permute.xlu0 0
    %232 = vperm.xlu0 %231, %v226
    %v233 = vpop.permute.xlu0 %232
    %236 = vset.pattern.permute.xlu0 0
    %237 = vperm.xlu0 %236, %v227
    %v238 = vpop.permute.xlu0 %237
    %241 = vset.pattern.permute.xlu0 0
    %242 = vperm.xlu0 %241, %v228
    %v243 = vpop.permute.xlu0 %242
    %246 = vset.pattern.permute.xlu0 0
    %247 = vperm.xlu0 %246, %v229
    %v248 = vpop.permute.xlu0 %247
    %vm250 = vcmask 523264
    %v252 = vsel %vm250, %v222, 0
    %v255 = vsel %vm250, %v223, 0
    %v258 = vsel %vm250, %v224, 0
    %v261 = vsel %vm250, %v225, 0
    %263 = vmatprep.subr.mxu0 0.0
    %264 = vmatpush1.msra.mxu0 %v214
    %265 = vmatprep.subr.mxu0 0.0
    %266 = vmatpush1.msra.mxu0 %v215
    %267 = vmatprep.subr.mxu0 0.0
    %268 = vmatpush1.msra.mxu0 %v216
    %269 = vmatprep.subr.mxu0 0.0
    %270 = vmatpush1.msra.mxu0 %v217
    %271 = vmatprep.subr.mxu0 0.0
    %272 = vmatpush1.msra.mxu0 %v218
    %273 = vmatprep.subr.mxu0 0.0
    %274 = vmatpush1.msra.mxu0 %v219
    %275 = vmatprep.subr.mxu0 0.0
    %276 = vmatpush1.msra.mxu0 %v220
    %277 = vmatprep.subr.mxu0 0.0
    %278 = vmatpush1.msra.mxu0 %v221
    %279 = vmatprep.subr.mxu0 0.0
    %280 = vmatpush1.msra.mxu0 0.0
    %281 = vmatprep.subr.mxu0 0.0
    %282 = vmatpush1.msra.mxu0 0.0
    %283 = vmatprep.subr.mxu0 0.0
    %284 = vmatpush1.msra.mxu0 0.0
    %285 = vmatprep.subr.mxu0 0.0
    %286 = vmatpush1.msra.mxu0 0.0
    %287 = vmatprep.subr.mxu0 0.0
    %288 = vmatpush1.msra.mxu0 0.0
    %289 = vmatprep.subr.mxu0 0.0
    %290 = vmatpush1.msra.mxu0 0.0
    %291 = vmatprep.subr.mxu0 0.0
    %292 = vmatpush1.msra.mxu0 0.0
    %293 = vmatprep.subr.mxu0 0.0
    %294 = vmatpush1.msra.mxu0 0.0
    %295 = vmatprep.subr.mxu0 0.0
    %296 = vmatpush1.msra.mxu0 0.0
    %297 = vmatprep.subr.mxu0 0.0
    %298 = vmatpush1.msra.mxu0 0.0
    %299 = vmatprep.subr.mxu0 0.0
    %300 = vmatpush1.msra.mxu0 0.0
    %301 = vmatprep.subr.mxu0 0.0
    %302 = vmatpush1.msra.mxu0 0.0
    %303 = vmatprep.subr.mxu0 0.0
    %304 = vmatpush1.msra.mxu0 0.0
    %305 = vmatprep.subr.mxu0 0.0
    %306 = vmatpush1.msra.mxu0 0.0
    %307 = vmatprep.subr.mxu0 0.0
    %308 = vmatpush1.msra.mxu0 0.0
    %309 = vmatprep.subr.mxu0 0.0
    %310 = vmatpush1.msra.mxu0 0.0
    %311 = vmatprep.subr.mxu0 0.0
    %312 = vmatpush1.msra.mxu0 0.0
    %313 = vmatprep.subr.mxu0 0.0
    %314 = vmatpush1.msra.mxu0 0.0
    %315 = vmatprep.subr.mxu0 0.0
    %316 = vmatpush1.msra.mxu0 0.0
    %317 = vmatprep.subr.mxu0 0.0
    %318 = vmatpush1.msra.mxu0 0.0
    %319 = vmatprep.subr.mxu0 0.0
    %320 = vmatpush1.msra.mxu0 0.0
    %321 = vmatprep.subr.mxu0 0.0
    %322 = vmatpush1.msra.mxu0 0.0
    %323 = vmatprep.subr.mxu0 0.0
    %324 = vmatpush1.msra.mxu0 0.0
    %325 = vmatprep.subr.mxu0 0.0
    %326 = vmatpush1.msra.mxu0 0.0
    %327 = vmatprep.mubr.f32.mxu0 0.0
    %328 = vmatmul.mubr.f32.gmra.mrb[0].mxu0 %v252
    %v329 = vpop.f32.mrb[0].mxu0
    %v330 = vadd.f32 %v233, %v329
    %v331 = vpop.f32.mrb[0].mxu0
    %332 = vmatprep.mubr.f32.mxu0 0.0
    %333 = vmatmul.mubr.f32.gmra.mrb[0].mxu0 %v255
    %v334 = vpop.f32.mrb[0].mxu0
    %v335 = vadd.f32 %v238, %v334
    %v336 = vpop.f32.mrb[0].mxu0
    %337 = vmatprep.mubr.f32.mxu0 0.0
    %338 = vmatmul.mubr.f32.gmra.mrb[0].mxu0 %v258
    %v339 = vpop.f32.mrb[0].mxu0
    %v340 = vadd.f32 %v243, %v339
    %v341 = vpop.f32.mrb[0].mxu0
    %342 = vmatprep.mubr.f32.mxu0 0.0
    %343 = vmatmul.mubr.f32.gmra.mrb[0].mxu0 %v261
    %v344 = vpop.f32.mrb[0].mxu0
    %v345 = vadd.f32 %v248, %v344
    %v346 = vpop.f32.mrb[0].mxu0
    %347 = vdwg.mxu0
    %v348 = vmax.f32 %v330, 0.0
    %v349 = vmax.f32 %v335, 0.0
    %v350 = vmax.f32 %v340, 0.0
    %v351 = vmax.f32 %v345, 0.0
    %v352 = vld [vmem:[%s5] sm:$0xff]
    %v353 = vld [vmem:[%s5 + $0x8] sm:$0xff]
    %v354 = vld [vmem:[%s5 + $0x10] sm:$0xff]
    %v355 = vld [vmem:[%s5 + $0x18] sm:$0xff]
    %357 = vset.pattern.permute.xlu0 0
    %358 = vperm.xlu0 %357, %v352
    %v359 = vpop.permute.xlu0 %358
    %362 = vset.pattern.permute.xlu0 0
    %363 = vperm.xlu0 %362, %v353
    %v364 = vpop.permute.xlu0 %363
    %367 = vset.pattern.permute.xlu0 0
    %368 = vperm.xlu0 %367, %v354
    %v369 = vpop.permute.xlu0 %368
    %372 = vset.pattern.permute.xlu0 0
    %373 = vperm.xlu0 %372, %v355
    %v374 = vpop.permute.xlu0 %373
    %v376 = vmul.f32 %v348, %v359
    %v377 = vmul.f32 %v349, %v364
    %v378 = vmul.f32 %v350, %v369
    %v379 = vmul.f32 %v351, %v374
    %vm380 = vcmask 130048
    %v381 = vsel %vm380, %v376, 0.0
    %v382 = vsel %vm380, %v377, 0.0
    %v383 = vadd.f32 %v381, %v382
    %v384 = vsel %vm380, %v378, 0.0
    %v385 = vadd.f32 %v383, %v384
    %v386 = vsel %vm380, %v379, 0.0
    %v387 = vadd.f32 %v385, %v386
    %v388 = vrot.slane %v387, 4
    %v389 = vadd.f32 %v387, %v388
    %v390 = vrot.slane %v389, 2
    %v391 = vadd.f32 %v389, %v390
    %v392 = vrot.slane %v391, 1
    %v393 = vadd.f32 %v391, %v392
    %vm394 = vcmask 122880
    %395 = vst.msk [vmem:[#allocation2] sm:$0x1] %vm394, %v393
    // Predicated region
    $region26: #{discriminator_forward.1} parent=1 // pred_check
      _
    $region27: #{discriminator_forward.1} parent=1 // pred_check_branch
      %397 = sbr.rel (0) target = $region29
    $region28: #{discriminator_forward.1} parent=1 // pred_region
      %s399 = ssub.s32 16, 16
      %400 = vsyncadd [#allocation3], %s399
      %s402 = sshll.u32 [#allocation2], 4
      %s403 = int_to_ptr.vmem [resolvable:$true] %s402
      %405 = dma.vmem_to_hbm [thread:$0]  %s403, 16, %s6, [#allocation3]
    $region29: #{discriminator_forward.1} parent=1 // pred_fallthru
      _
    // Predicated region
    $region30: #{discriminator_forward.1} parent=1 // pred_check
      _
    $region31: #{discriminator_forward.1} parent=1 // pred_check_branch
      %407 = sbr.rel (0) target = $region33
    $region32: #{discriminator_forward.1} parent=1 // pred_region
      %408 = dma.done [#allocation3], 16
    $region33: #{discriminator_forward.1} parent=1 // pred_fallthru
      _
    %409 = vsyncpa [#allocation3], 1

</llo_original>
